<compile_context>
chip_gen: v7x
topology: tpu7x:2x2x1
jax: 0.10.0
libtpu: 0.0.40
codegen_flags: <defaults>
</compile_context>

<pallas_src>
from functools import partial

import jax
import jax.numpy as jnp
from jax import lax
from jax.experimental import pallas as pl
from jax.experimental.pallas import tpu as pltpu


def dwsep_kernel(x_ref, wdw_ref, bdw_ref, wpw_ref, bpw_ref, o_ref,
                 *, H, W, C, O, Nb):
    HW = H * W
    x = x_ref[0]                                     # (Nb*C, HW), spatial on lanes

    # ---- depthwise 3x3, stride 1, pad 1 (groups = C) ----
    # BN1 scale and the zero-pad halo mask are already folded into wdw_ref, so each
    # tap is exactly one XLU roll + one VPU multiply-accumulate.
    acc = x * wdw_ref[4]                             # center tap (1,1): no roll
    for dy in (-1, 0, 1):
        for dx in (-1, 0, 1):
            if dy == 0 and dx == 0:
                continue
            t = (dy + 1) * 3 + (dx + 1)              # PyTorch (kh, kw) tap index
            k = dy * W + dx                          # flat-index offset of the tap
            shifted = pltpu.roll(x, (-k) % HW, axis=1)   # shifted[p] == x[p + k]
            acc = acc + shifted * wdw_ref[t]

    # ---- BN1 bias + ReLU ----
    h = jnp.maximum(acc + bdw_ref[...], 0.0)         # (Nb*C, HW)

    # ---- pointwise 1x1 conv (BN2 scale folded into wpw) + BN2 bias + ReLU ----
    # Per packed image: C broadcast-MACs on the VPU.  MXU crossover is at C,O ~ 64+.
    for i in range(Nb):
        hi = h[i * C:(i + 1) * C]                    # (C, HW)
        out = wpw_ref[0] * hi[0:1, :]                # (O,1) * (1,HW)
        for c in range(1, C):
            out = out + wpw_ref[c] * hi[c:c + 1, :]
        o_ref[0, i * O:(i + 1) * O, :] = jnp.maximum(out + bpw_ref[...], 0.0)


def _pick_nb(N, C):
    """Largest sublane-packing factor that divides N, fits 8 sublanes, and keeps
    the grid length >= 2 when N >= 2 (so both v7x TensorCores get work)."""
    max_pack = max(1, 8 // C)
    best = 1
    for nb in range(1, max_pack + 1):
        if N % nb == 0 and (N // nb >= 2 or N == 1):
            best = nb
    return best


def dw_separable_conv(x_nchw, w_dw, s_dw, b_dw, w_pw, s_pw, b_pw):
    """DWSeparableConv forward (eval-mode BN folded into scale/bias).

    x_nchw : (N, C, H, W)  input, PyTorch NCHW layout
    w_dw   : (C, 1, 3, 3)  depthwise conv weight (PyTorch layout)
    w_pw   : (O, C, 1, 1)  pointwise conv weight (PyTorch layout)
    s_dw, b_dw : (C,)      folded BN1 scale / bias
    s_pw, b_pw : (O,)      folded BN2 scale / bias
    returns (N, O, H, W)
    """
    N, C, H, W = x_nchw.shape
    O = w_pw.shape[0]
    HW = H * W

    Nb = _pick_nb(N, C)
    G = N // Nb                                       # grid length

    # --- wrapper-side (one-time) layout + folding; NO padded copy of x ---
    x2 = x_nchw.reshape(G, Nb * C, HW)                # pack Nb images on sublanes

    # Tap-validity mask for zero padding: (9, HW), 1 where the shifted tap stays
    # inside the image.  Valid only for 3x3 / stride 1 / pad 1 / dilation 1.
    yy, xx = jnp.meshgrid(jnp.arange(H), jnp.arange(W), indexing="ij")
    yy = yy.reshape(-1)
    xx = xx.reshape(-1)
    masks = []
    for dy in (-1, 0, 1):
        for dx in (-1, 0, 1):
            valid = ((yy + dy >= 0) & (yy + dy < H) &
                     (xx + dx >= 0) & (xx + dx < W))
            masks.append(valid.astype(jnp.float32))
    mask9 = jnp.stack(masks, axis=0)                  # (9, HW)

    # Fold BN1 scale into the depthwise weights, fold in the halo mask, and tile
    # across the Nb packed images: (9, Nb*C, HW), resident in VMEM.
    wdw_s = jnp.transpose(w_dw.reshape(C, 9) * s_dw[:, None], (1, 0))   # (9, C)
    wdw_masked = wdw_s[:, :, None] * mask9[:, None, :]                  # (9, C, HW)
    wdw_masked = jnp.tile(wdw_masked, (1, Nb, 1))                       # (9, Nb*C, HW)
    bdw = jnp.tile(b_dw, Nb).reshape(Nb * C, 1)

    # Fold BN2 scale into the pointwise weights: wpwc[c, o] = s_pw[o] * w_pw[o, c].
    wpwc = jnp.transpose(w_pw.reshape(O, C) * s_pw[:, None], (1, 0)).reshape(C, O, 1)
    bpw = b_pw.reshape(O, 1)

    kernel = partial(dwsep_kernel, H=H, W=W, C=C, O=O, Nb=Nb)
    out = pl.pallas_call(
        kernel,
        out_shape=jax.ShapeDtypeStruct((G, Nb * O, HW), jnp.float32),
        grid=(G,),
        in_specs=[
            pl.BlockSpec((1, Nb * C, HW), lambda g: (g, 0, 0)),
            pl.BlockSpec((9, Nb * C, HW), lambda g: (0, 0, 0)),   # resident weights
            pl.BlockSpec((Nb * C, 1), lambda g: (0, 0)),
            pl.BlockSpec((C, O, 1), lambda g: (0, 0, 0)),
            pl.BlockSpec((O, 1), lambda g: (0, 0)),
        ],
        out_specs=pl.BlockSpec((1, Nb * O, HW), lambda g: (g, 0, 0)),
        compiler_params=pltpu.CompilerParams(dimension_semantics=("parallel",)),
    )(x2, wdw_masked, bdw, wpwc, bpw)

    return out.reshape(N, O, H, W)                    # NCHW, matches PyTorch


def _bn_fold(gamma, beta, mean, var, eps=1e-5):
    scale = gamma / jnp.sqrt(var + eps)
    bias = beta - mean * scale
    return scale, bias


def _reference(x_nchw, w_dw, s_dw, b_dw, w_pw, s_pw, b_pw):
    """Pure-JAX NCHW reference (PyTorch semantics) for correctness check."""
    C = x_nchw.shape[1]
    h = lax.conv_general_dilated(
        x_nchw, w_dw, window_strides=(1, 1), padding=((1, 1), (1, 1)),
        dimension_numbers=("NCHW", "OIHW", "NCHW"), feature_group_count=C)
    h = jnp.maximum(h * s_dw.reshape(1, -1, 1, 1) + b_dw.reshape(1, -1, 1, 1), 0.0)
    y = lax.conv_general_dilated(
        h, w_pw, window_strides=(1, 1), padding=((0, 0), (0, 0)),
        dimension_numbers=("NCHW", "OIHW", "NCHW"))
    y = jnp.maximum(y * s_pw.reshape(1, -1, 1, 1) + b_pw.reshape(1, -1, 1, 1), 0.0)
    return y


if __name__ == "__main__":
    # DWSeparableConv(inp=4, oup=8) on a (2, 4, 16, 16) NCHW input.
    N, C, O, H, W = 2, 4, 8, 16, 16

    key = jax.random.PRNGKey(0)
    ks = jax.random.split(key, 11)

    x = jax.random.normal(ks[0], (N, C, H, W), jnp.float32)           # NCHW input
    w_dw = jax.random.normal(ks[1], (C, 1, 3, 3), jnp.float32) * 0.3  # dwc weight
    w_pw = jax.random.normal(ks[2], (O, C, 1, 1), jnp.float32) * 0.3  # pwc weight

    # BatchNorm parameters (eval mode), deterministic.
    g1 = 1.0 + 0.1 * jax.random.normal(ks[3], (C,), jnp.float32)
    b1 = 0.1 * jax.random.normal(ks[4], (C,), jnp.float32)
    m1 = 0.1 * jax.random.normal(ks[5], (C,), jnp.float32)
    v1 = 1.0 + 0.1 * jnp.abs(jax.random.normal(ks[6], (C,), jnp.float32))
    g2 = 1.0 + 0.1 * jax.random.normal(ks[7], (O,), jnp.float32)
    b2 = 0.1 * jax.random.normal(ks[8], (O,), jnp.float32)
    m2 = 0.1 * jax.random.normal(ks[9], (O,), jnp.float32)
    v2 = 1.0 + 0.1 * jnp.abs(jax.random.normal(ks[10], (O,), jnp.float32))

    s1, bias1 = _bn_fold(g1, b1, m1, v1)
    s2, bias2 = _bn_fold(g2, b2, m2, v2)

    out = dw_separable_conv(x, w_dw, s1, bias1, w_pw, s2, bias2)
    out = jax.block_until_ready(out)

    ref = _reference(x, w_dw, s1, bias1, w_pw, s2, bias2)
    assert out.shape == (N, O, H, W)
    assert jnp.allclose(out, ref, atol=1e-4, rtol=1e-4), "mismatch vs JAX reference"

    print("KERNEL_OK")
</pallas_src>

<mosaic_0001>
module attributes {stable_mosaic.version = 11 : i64} {
  func.func @dwsep_kernel(%arg0: i32, %arg1: memref<1x4x256xf32, #tpu.memory_space<vmem>>, %arg2: memref<9x4x256xf32, #tpu.memory_space<vmem>>, %arg3: memref<4x1xf32, #tpu.memory_space<vmem>>, %arg4: memref<4x8x1xf32, #tpu.memory_space<vmem>>, %arg5: memref<8x1xf32, #tpu.memory_space<vmem>>, %arg6: memref<1x8x256xf32, #tpu.memory_space<vmem>>) attributes {dimension_semantics = [#tpu.dimension_semantics<parallel>], iteration_bounds = array<i64: 2>, scalar_prefetch = 0 : i64, scratch_operands = 0 : i64, tpu.core_type = #tpu.core_type<tc>, window_params = [{transform_indices = @transform_0, window_bounds = array<i64: 1, 4, 256>}, {pipeline_mode = #tpu.pipeline_mode<synchronous>, transform_indices = @transform_1, window_bounds = array<i64: 9, 4, 256>}, {pipeline_mode = #tpu.pipeline_mode<synchronous>, transform_indices = @transform_2, window_bounds = array<i64: 4, 1>}, {pipeline_mode = #tpu.pipeline_mode<synchronous>, transform_indices = @transform_3, window_bounds = array<i64: 4, 8, 1>}, {pipeline_mode = #tpu.pipeline_mode<synchronous>, transform_indices = @transform_4, window_bounds = array<i64: 8, 1>}, {transform_indices = @transform_5, window_bounds = array<i64: 1, 8, 256>}]} {
    %c0 = arith.constant 0 : index
    %c0_0 = arith.constant 0 : index
    %c0_1 = arith.constant 0 : index
    %0 = vector.load %arg1[%c0, %c0_0, %c0_1] : memref<1x4x256xf32, #tpu.memory_space<vmem>>, vector<1x4x256xf32>
    %1 = vector.shape_cast %0 : vector<1x4x256xf32> to vector<4x256xf32>
    %c4 = arith.constant 4 : index
    %c0_2 = arith.constant 0 : index
    %c0_3 = arith.constant 0 : index
    %2 = vector.load %arg2[%c4, %c0_2, %c0_3] : memref<9x4x256xf32, #tpu.memory_space<vmem>>, vector<1x4x256xf32>
    %3 = vector.shape_cast %2 : vector<1x4x256xf32> to vector<4x256xf32>
    %4 = arith.mulf %1, %3 : vector<4x256xf32>
    %c17_i32 = arith.constant 17 : i32
    %5 = tpu.dynamic_rotate %1 by %c17_i32 dim 1 : vector<4x256xf32>, i32 -> vector<4x256xf32>
    %c0_4 = arith.constant 0 : index
    %c0_5 = arith.constant 0 : index
    %c0_6 = arith.constant 0 : index
    %6 = vector.load %arg2[%c0_4, %c0_5, %c0_6] : memref<9x4x256xf32, #tpu.memory_space<vmem>>, vector<1x4x256xf32>
    %7 = vector.shape_cast %6 : vector<1x4x256xf32> to vector<4x256xf32>
    %8 = arith.mulf %5, %7 : vector<4x256xf32>
    %9 = arith.addf %4, %8 : vector<4x256xf32>
    %c16_i32 = arith.constant 16 : i32
    %10 = tpu.dynamic_rotate %1 by %c16_i32 dim 1 : vector<4x256xf32>, i32 -> vector<4x256xf32>
    %c1 = arith.constant 1 : index
    %c0_7 = arith.constant 0 : index
    %c0_8 = arith.constant 0 : index
    %11 = vector.load %arg2[%c1, %c0_7, %c0_8] : memref<9x4x256xf32, #tpu.memory_space<vmem>>, vector<1x4x256xf32>
    %12 = vector.shape_cast %11 : vector<1x4x256xf32> to vector<4x256xf32>
    %13 = arith.mulf %10, %12 : vector<4x256xf32>
    %14 = arith.addf %9, %13 : vector<4x256xf32>
    %c15_i32 = arith.constant 15 : i32
    %15 = tpu.dynamic_rotate %1 by %c15_i32 dim 1 : vector<4x256xf32>, i32 -> vector<4x256xf32>
    %c2 = arith.constant 2 : index
    %c0_9 = arith.constant 0 : index
    %c0_10 = arith.constant 0 : index
    %16 = vector.load %arg2[%c2, %c0_9, %c0_10] : memref<9x4x256xf32, #tpu.memory_space<vmem>>, vector<1x4x256xf32>
    %17 = vector.shape_cast %16 : vector<1x4x256xf32> to vector<4x256xf32>
    %18 = arith.mulf %15, %17 : vector<4x256xf32>
    %19 = arith.addf %14, %18 : vector<4x256xf32>
    %c1_i32 = arith.constant 1 : i32
    %20 = tpu.dynamic_rotate %1 by %c1_i32 dim 1 : vector<4x256xf32>, i32 -> vector<4x256xf32>
    %c3 = arith.constant 3 : index
    %c0_11 = arith.constant 0 : index
    %c0_12 = arith.constant 0 : index
    %21 = vector.load %arg2[%c3, %c0_11, %c0_12] : memref<9x4x256xf32, #tpu.memory_space<vmem>>, vector<1x4x256xf32>
    %22 = vector.shape_cast %21 : vector<1x4x256xf32> to vector<4x256xf32>
    %23 = arith.mulf %20, %22 : vector<4x256xf32>
    %24 = arith.addf %19, %23 : vector<4x256xf32>
    %c255_i32 = arith.constant 255 : i32
    %25 = tpu.dynamic_rotate %1 by %c255_i32 dim 1 : vector<4x256xf32>, i32 -> vector<4x256xf32>
    %c5 = arith.constant 5 : index
    %c0_13 = arith.constant 0 : index
    %c0_14 = arith.constant 0 : index
    %26 = vector.load %arg2[%c5, %c0_13, %c0_14] : memref<9x4x256xf32, #tpu.memory_space<vmem>>, vector<1x4x256xf32>
    %27 = vector.shape_cast %26 : vector<1x4x256xf32> to vector<4x256xf32>
    %28 = arith.mulf %25, %27 : vector<4x256xf32>
    %29 = arith.addf %24, %28 : vector<4x256xf32>
    %c241_i32 = arith.constant 241 : i32
    %30 = tpu.dynamic_rotate %1 by %c241_i32 dim 1 : vector<4x256xf32>, i32 -> vector<4x256xf32>
    %c6 = arith.constant 6 : index
    %c0_15 = arith.constant 0 : index
    %c0_16 = arith.constant 0 : index
    %31 = vector.load %arg2[%c6, %c0_15, %c0_16] : memref<9x4x256xf32, #tpu.memory_space<vmem>>, vector<1x4x256xf32>
    %32 = vector.shape_cast %31 : vector<1x4x256xf32> to vector<4x256xf32>
    %33 = arith.mulf %30, %32 : vector<4x256xf32>
    %34 = arith.addf %29, %33 : vector<4x256xf32>
    %c240_i32 = arith.constant 240 : i32
    %35 = tpu.dynamic_rotate %1 by %c240_i32 dim 1 : vector<4x256xf32>, i32 -> vector<4x256xf32>
    %c7 = arith.constant 7 : index
    %c0_17 = arith.constant 0 : index
    %c0_18 = arith.constant 0 : index
    %36 = vector.load %arg2[%c7, %c0_17, %c0_18] : memref<9x4x256xf32, #tpu.memory_space<vmem>>, vector<1x4x256xf32>
    %37 = vector.shape_cast %36 : vector<1x4x256xf32> to vector<4x256xf32>
    %38 = arith.mulf %35, %37 : vector<4x256xf32>
    %39 = arith.addf %34, %38 : vector<4x256xf32>
    %c239_i32 = arith.constant 239 : i32
    %40 = tpu.dynamic_rotate %1 by %c239_i32 dim 1 : vector<4x256xf32>, i32 -> vector<4x256xf32>
    %c8 = arith.constant 8 : index
    %c0_19 = arith.constant 0 : index
    %c0_20 = arith.constant 0 : index
    %41 = vector.load %arg2[%c8, %c0_19, %c0_20] : memref<9x4x256xf32, #tpu.memory_space<vmem>>, vector<1x4x256xf32>
    %42 = vector.shape_cast %41 : vector<1x4x256xf32> to vector<4x256xf32>
    %43 = arith.mulf %40, %42 : vector<4x256xf32>
    %44 = arith.addf %39, %43 : vector<4x256xf32>
    %c0_21 = arith.constant 0 : index
    %c0_22 = arith.constant 0 : index
    %45 = vector.load %arg3[%c0_21, %c0_22] : memref<4x1xf32, #tpu.memory_space<vmem>>, vector<4x1xf32>
    %46 = vector.broadcast %45 : vector<4x1xf32> to vector<4x256xf32>
    %47 = arith.addf %44, %46 : vector<4x256xf32>
    %cst = arith.constant 0.000000e+00 : f32
    %48 = vector.broadcast %cst : f32 to vector<4x256xf32>
    %49 = arith.maximumf %47, %48 : vector<4x256xf32>
    %c0_23 = arith.constant 0 : index
    %c0_24 = arith.constant 0 : index
    %c0_25 = arith.constant 0 : index
    %50 = vector.load %arg4[%c0_23, %c0_24, %c0_25] : memref<4x8x1xf32, #tpu.memory_space<vmem>>, vector<1x8x1xf32>
    %51 = vector.shape_cast %50 : vector<1x8x1xf32> to vector<8x1xf32>
    %52 = vector.extract_strided_slice %49 {offsets = [0, 0], sizes = [1, 256], strides = [1, 1]} : vector<4x256xf32> to vector<1x256xf32>
    %53 = vector.broadcast %51 : vector<8x1xf32> to vector<8x256xf32>
    %54 = vector.broadcast %52 : vector<1x256xf32> to vector<8x256xf32>
    %55 = arith.mulf %53, %54 : vector<8x256xf32>
    %c1_26 = arith.constant 1 : index
    %c0_27 = arith.constant 0 : index
    %c0_28 = arith.constant 0 : index
    %56 = vector.load %arg4[%c1_26, %c0_27, %c0_28] : memref<4x8x1xf32, #tpu.memory_space<vmem>>, vector<1x8x1xf32>
    %57 = vector.shape_cast %56 : vector<1x8x1xf32> to vector<8x1xf32>
    %58 = vector.extract_strided_slice %49 {offsets = [1, 0], sizes = [1, 256], strides = [1, 1]} : vector<4x256xf32> to vector<1x256xf32>
    %59 = vector.broadcast %57 : vector<8x1xf32> to vector<8x256xf32>
    %60 = vector.broadcast %58 : vector<1x256xf32> to vector<8x256xf32>
    %61 = arith.mulf %59, %60 : vector<8x256xf32>
    %62 = arith.addf %55, %61 : vector<8x256xf32>
    %c2_29 = arith.constant 2 : index
    %c0_30 = arith.constant 0 : index
    %c0_31 = arith.constant 0 : index
    %63 = vector.load %arg4[%c2_29, %c0_30, %c0_31] : memref<4x8x1xf32, #tpu.memory_space<vmem>>, vector<1x8x1xf32>
    %64 = vector.shape_cast %63 : vector<1x8x1xf32> to vector<8x1xf32>
    %65 = vector.extract_strided_slice %49 {offsets = [2, 0], sizes = [1, 256], strides = [1, 1]} : vector<4x256xf32> to vector<1x256xf32>
    %66 = vector.broadcast %64 : vector<8x1xf32> to vector<8x256xf32>
    %67 = vector.broadcast %65 : vector<1x256xf32> to vector<8x256xf32>
    %68 = arith.mulf %66, %67 : vector<8x256xf32>
    %69 = arith.addf %62, %68 : vector<8x256xf32>
    %c3_32 = arith.constant 3 : index
    %c0_33 = arith.constant 0 : index
    %c0_34 = arith.constant 0 : index
    %70 = vector.load %arg4[%c3_32, %c0_33, %c0_34] : memref<4x8x1xf32, #tpu.memory_space<vmem>>, vector<1x8x1xf32>
    %71 = vector.shape_cast %70 : vector<1x8x1xf32> to vector<8x1xf32>
    %72 = vector.extract_strided_slice %49 {offsets = [3, 0], sizes = [1, 256], strides = [1, 1]} : vector<4x256xf32> to vector<1x256xf32>
    %73 = vector.broadcast %71 : vector<8x1xf32> to vector<8x256xf32>
    %74 = vector.broadcast %72 : vector<1x256xf32> to vector<8x256xf32>
    %75 = arith.mulf %73, %74 : vector<8x256xf32>
    %76 = arith.addf %69, %75 : vector<8x256xf32>
    %c0_35 = arith.constant 0 : index
    %c0_36 = arith.constant 0 : index
    %77 = vector.load %arg5[%c0_35, %c0_36] : memref<8x1xf32, #tpu.memory_space<vmem>>, vector<8x1xf32>
    %78 = vector.broadcast %77 : vector<8x1xf32> to vector<8x256xf32>
    %79 = arith.addf %76, %78 : vector<8x256xf32>
    %cst_37 = arith.constant 0.000000e+00 : f32
    %80 = vector.broadcast %cst_37 : f32 to vector<8x256xf32>
    %81 = arith.maximumf %79, %80 : vector<8x256xf32>
    %c0_38 = arith.constant 0 : index
    %c0_39 = arith.constant 0 : index
    %c0_40 = arith.constant 0 : index
    %82 = vector.load %arg6[%c0_38, %c0_39, %c0_40] : memref<1x8x256xf32, #tpu.memory_space<vmem>>, vector<1x8x256xf32>
    %83 = vector.shape_cast %82 : vector<1x8x256xf32> to vector<8x256xf32>
    %84 = vector.shape_cast %81 : vector<8x256xf32> to vector<1x8x256xf32>
    tpu.vector_store %arg6[%c0_38, %c0_39, %c0_40], %84 {strides = array<i32>} : memref<1x8x256xf32, #tpu.memory_space<vmem>>, vector<1x8x256xf32>,
    return
  }
  func.func @transform_0(%arg0: i32) -> (i32, i32, i32) {
    %c0_i32 = arith.constant 0 : i32
    %c0_i32_0 = arith.constant 0 : i32
    %c0_i32_1 = arith.constant 0 : i32
    return %arg0, %c0_i32, %c0_i32_0 : i32, i32, i32
  }
  func.func @transform_1(%arg0: i32) -> (i32, i32, i32) {
    %c0_i32 = arith.constant 0 : i32
    %c0_i32_0 = arith.constant 0 : i32
    %c0_i32_1 = arith.constant 0 : i32
    %c0_i32_2 = arith.constant 0 : i32
    return %c0_i32, %c0_i32_0, %c0_i32_1 : i32, i32, i32
  }
  func.func @transform_2(%arg0: i32) -> (i32, i32) {
    %c0_i32 = arith.constant 0 : i32
    %c0_i32_0 = arith.constant 0 : i32
    %c0_i32_1 = arith.constant 0 : i32
    return %c0_i32, %c0_i32_0 : i32, i32
  }
  func.func @transform_3(%arg0: i32) -> (i32, i32, i32) {
    %c0_i32 = arith.constant 0 : i32
    %c0_i32_0 = arith.constant 0 : i32
    %c0_i32_1 = arith.constant 0 : i32
    %c0_i32_2 = arith.constant 0 : i32
    return %c0_i32, %c0_i32_0, %c0_i32_1 : i32, i32, i32
  }
  func.func @transform_4(%arg0: i32) -> (i32, i32) {
    %c0_i32 = arith.constant 0 : i32
    %c0_i32_0 = arith.constant 0 : i32
    %c0_i32_1 = arith.constant 0 : i32
    return %c0_i32, %c0_i32_0 : i32, i32
  }
  func.func @transform_5(%arg0: i32) -> (i32, i32, i32) {
    %c0_i32 = arith.constant 0 : i32
    %c0_i32_0 = arith.constant 0 : i32
    %c0_i32_1 = arith.constant 0 : i32
    return %arg0, %c0_i32, %c0_i32_0 : i32, i32, i32
  }
}

</mosaic_0001>

<llo_original>
// kernel: tpu_custom_call.1
$region0: #{tpu_custom_call.1}
  #allocation0 [shape = 'u32[]', space=smem, size = 0x4, offset = 0x4, fixed_abs, tag = 'smem constant byte address 0x4 - core index']
  #allocation1 [shape = 'u32[144,128]{1,0:T(1,128)}', space=vmem, size = 0x12000, scoped, tag = 'internal scratch']
  %s0 = inlined_call_operand.vmem [shape: f32[2,4,256], index: 0, kind: input, shape index: {}]
  %s1 = inlined_call_operand.hbm [shape: f32[9,4,256], index: 1, kind: input, shape index: {}]
  %s2 = inlined_call_operand.vmem [shape: f32[4,1], index: 2, kind: input, shape index: {}]
  %s3 = inlined_call_operand.vmem [shape: f32[4,8,1], index: 3, kind: input, shape index: {}]
  %s4 = inlined_call_operand.vmem [shape: f32[8,1], index: 4, kind: input, shape index: {}]
  %s5 = inlined_call_operand.hbm [shape: f32[2,8,256], index: 5, kind: output, shape index: {}]
  %s6 = sld [smem:[#allocation0]]
  $region57: #{tpu_custom_call.1} parent=0
    _
  %s8 = ssub.s32 1, %s6
  %s9 = scalar_select 0, %s8, %s6
  $region1: #{tpu_custom_call.1} parent=0
    #allocation2 [shape = 'u8[36864]{0}', space=vmem, size = 0x9000, scoped, tag = 'input window, operand 1, single buffered']
    #allocation3 [shape = 's32[2]{0}', space=sflag, size = 0x8, scoped, tag = 'scoped memory for tpu_custom_call.1']
    #allocation4 [shape = 's32[2]{0}', space=sflag, size = 0x8, scoped, tag = 'scoped memory for tpu_custom_call.1']
    #allocation5 [shape = 'u8[16384]{0}', space=vmem, size = 0x4000, scoped, tag = 'output window, operand 0']
    %10 = vsyncpa [#allocation3], 0
    %11 = vsyncpa [#allocation4], 0
    %s12 = scalar_lea.sflag [#allocation4], 1
    %13 = vsyncpa %s12, 0
    loop: start=0, step=1, limit=4
    $region2: #{tpu_custom_call.1} parent=1 // loop_pre_header
      _
    $region3: #{tpu_custom_call.1} parent=1 // loop_header
      %s15 = sphi 0, %s19
      %p16 = scmp.ge.s32.totalorder %s15, 4
      %s25 = sphi 0, %s27
      %s28 = sphi 0, %s25
      %s29 = sphi 0, %s28
      %s45 = sphi 0, %s29
      %s49 = sphi 0, %s49
      %s51 = sphi 0, %s49
      %s52 = sphi 0, %s51
      %s66 = sphi 0, %s52
      %s70 = sphi 0, %s70
      %s72 = sphi 0, %s70
      %s73 = sphi 0, %s72
      %s87 = sphi 0, %s73
      %s91 = sphi 0, %s91
      %s93 = sphi 0, %s91
      %s94 = sphi 0, %s93
      %s108 = sphi 0, %s94
      %s112 = sphi 0, %s112
      %s114 = sphi 0, %s112
      %s115 = sphi 0, %s114
      %s129 = sphi 0, %s115
      %s135 = sphi 0, %s137
      %s138 = sphi 0, %s135
      %s139 = sphi 0, %s138
      %s155 = sphi 0, %s139
    $region4: #{tpu_custom_call.1} parent=1 // loop_header_branch
      %18 = sbr.rel (%p16) target = $region8
    $region5: #{tpu_custom_call.1} parent=1 // loop_body
      %s20 = ssub.s32 %s15, 1
      %s21 = ssub.s32 %s15, 2
      %s22 = sadd.s32 %s15, 1
      %s23 = ssub.s32 %s15, %s22
      %p24 = scmp.eq.s32.totalorder %s23, 0
      %s26 = sadd.s32 %s25, 1
      %s27 = scalar_select %p24, %s25, %s26
      %p30 = pneg %p24
      %p31 = scmp.eq.s32.totalorder %s15, 1
      %p32 = por %p30, %p31
      %p33 = scmp.ne.s32.totalorder %s25, %s28
      %p34 = scmp.eq.s32.totalorder %s15, 0
      %p35 = por %p33, %p34
      %p36 = scmp.ne.s32.totalorder %s25, %s28
      %p37 = scmp.eq.s32.totalorder %s20, 1
      %p38 = por %p36, %p37
      %p39 = scmp.ne.s32.totalorder %s28, %s29
      %p40 = scmp.eq.s32.totalorder %s20, 0
      %p41 = por %p39, %p40
      %p42 = scmp.ne.s32.totalorder %s28, %s29
      %p43 = scmp.eq.s32.totalorder %s21, 1
      %p44 = por %p42, %p43
      %p46 = scmp.ne.s32.totalorder %s29, %s45
      %p47 = scmp.eq.s32.totalorder %s21, 0
      %p48 = por %p46, %p47
      %s50 = sadd.s32 %s49, 1
      %p53 = scmp.eq.s32.totalorder %s15, 1
      %p54 = scmp.ne.s32.totalorder %s49, %s51
      %p55 = scmp.eq.s32.totalorder %s15, 0
      %p56 = por %p54, %p55
      %p57 = scmp.ne.s32.totalorder %s49, %s51
      %p58 = scmp.eq.s32.totalorder %s20, 1
      %p59 = por %p57, %p58
      %p60 = scmp.ne.s32.totalorder %s51, %s52
      %p61 = scmp.eq.s32.totalorder %s20, 0
      %p62 = por %p60, %p61
      %p63 = scmp.ne.s32.totalorder %s51, %s52
      %p64 = scmp.eq.s32.totalorder %s21, 1
      %p65 = por %p63, %p64
      %p67 = scmp.ne.s32.totalorder %s52, %s66
      %p68 = scmp.eq.s32.totalorder %s21, 0
      %p69 = por %p67, %p68
      %s71 = sadd.s32 %s70, 1
      %p74 = scmp.eq.s32.totalorder %s15, 1
      %p75 = scmp.ne.s32.totalorder %s70, %s72
      %p76 = scmp.eq.s32.totalorder %s15, 0
      %p77 = por %p75, %p76
      %p78 = scmp.ne.s32.totalorder %s70, %s72
      %p79 = scmp.eq.s32.totalorder %s20, 1
      %p80 = por %p78, %p79
      %p81 = scmp.ne.s32.totalorder %s72, %s73
      %p82 = scmp.eq.s32.totalorder %s20, 0
      %p83 = por %p81, %p82
      %p84 = scmp.ne.s32.totalorder %s72, %s73
      %p85 = scmp.eq.s32.totalorder %s21, 1
      %p86 = por %p84, %p85
      %p88 = scmp.ne.s32.totalorder %s73, %s87
      %p89 = scmp.eq.s32.totalorder %s21, 0
      %p90 = por %p88, %p89
      %s92 = sadd.s32 %s91, 1
      %p95 = scmp.eq.s32.totalorder %s15, 1
      %p96 = scmp.ne.s32.totalorder %s91, %s93
      %p97 = scmp.eq.s32.totalorder %s15, 0
      %p98 = por %p96, %p97
      %p99 = scmp.ne.s32.totalorder %s91, %s93
      %p100 = scmp.eq.s32.totalorder %s20, 1
      %p101 = por %p99, %p100
      %p102 = scmp.ne.s32.totalorder %s93, %s94
      %p103 = scmp.eq.s32.totalorder %s20, 0
      %p104 = por %p102, %p103
      %p105 = scmp.ne.s32.totalorder %s93, %s94
      %p106 = scmp.eq.s32.totalorder %s21, 1
      %p107 = por %p105, %p106
      %p109 = scmp.ne.s32.totalorder %s94, %s108
      %p110 = scmp.eq.s32.totalorder %s21, 0
      %p111 = por %p109, %p110
      %s113 = sadd.s32 %s112, 1
      %p116 = scmp.eq.s32.totalorder %s15, 1
      %p117 = scmp.ne.s32.totalorder %s112, %s114
      %p118 = scmp.eq.s32.totalorder %s15, 0
      %p119 = por %p117, %p118
      %p120 = scmp.ne.s32.totalorder %s112, %s114
      %p121 = scmp.eq.s32.totalorder %s20, 1
      %p122 = por %p120, %p121
      %p123 = scmp.ne.s32.totalorder %s114, %s115
      %p124 = scmp.eq.s32.totalorder %s20, 0
      %p125 = por %p123, %p124
      %p126 = scmp.ne.s32.totalorder %s114, %s115
      %p127 = scmp.eq.s32.totalorder %s21, 1
      %p128 = por %p126, %p127
      %p130 = scmp.ne.s32.totalorder %s115, %s129
      %p131 = scmp.eq.s32.totalorder %s21, 0
      %p132 = por %p130, %p131
      %s133 = ssub.s32 %s15, %s22
      %p134 = scmp.eq.s32.totalorder %s133, 0
      %s136 = sadd.s32 %s135, 1
      %s137 = scalar_select %p134, %s135, %s136
      %p140 = pneg %p134
      %p141 = scmp.eq.s32.totalorder %s15, 1
      %p142 = por %p140, %p141
      %p143 = scmp.ne.s32.totalorder %s135, %s138
      %p144 = scmp.eq.s32.totalorder %s15, 0
      %p145 = por %p143, %p144
      %p146 = scmp.ne.s32.totalorder %s135, %s138
      %p147 = scmp.eq.s32.totalorder %s20, 1
      %p148 = por %p146, %p147
      %p149 = scmp.ne.s32.totalorder %s138, %s139
      %p150 = scmp.eq.s32.totalorder %s20, 0
      %p151 = por %p149, %p150
      %p152 = scmp.ne.s32.totalorder %s138, %s139
      %p153 = scmp.eq.s32.totalorder %s21, 1
      %p154 = por %p152, %p153
      %p156 = scmp.ne.s32.totalorder %s139, %s155
      %p157 = scmp.eq.s32.totalorder %s21, 0
      %p158 = por %p156, %p157
      %p159 = scmp.le.s32.totalorder 1, %s15
      %p160 = scmp.lt.s32.totalorder %s15, 3
      %p161 = pnand %p159, %p160
      %p162 = pneg %p161
      // Predicated region
      $region9: #{tpu_custom_call.1} parent=5 // pred_check
        _
      $region10: #{tpu_custom_call.1} parent=5 // pred_check_branch
        %164 = sbr.rel (%p161) target = $region12
      $region11: #{tpu_custom_call.1} parent=5 // pred_region
        %s165 = ssub.s32 %s15, 1
        // Predicated region
        $region13: #{tpu_custom_call.1} parent=11 // pred_check
          %p166 = pneg %p62
        $region14: #{tpu_custom_call.1} parent=11 // pred_check_branch
          %168 = sbr.rel (%p166) target = $region16
        $region15: #{tpu_custom_call.1} parent=11 // pred_region
          %s170 = ssub.s32 1152, 1152
          %171 = vsyncadd [#allocation3], %s170
          %s172 = sshll.u32 [#allocation2], 4
          %s173 = int_to_ptr.vmem [resolvable:$true] %s172
          %178 = dma.hbm_to_vmem [thread:$0]  %s1, 1152, %s173, [#allocation3], 128, 128, 8
        $region16: #{tpu_custom_call.1} parent=11 // pred_fallthru
          _
        // Predicated region
        $region17: #{tpu_custom_call.1} parent=11 // pred_check
          %p179 = pneg %p83
        $region18: #{tpu_custom_call.1} parent=11 // pred_check_branch
          %181 = sbr.rel (%p179) target = $region20
        $region19: #{tpu_custom_call.1} parent=11 // pred_region
          _
        $region20: #{tpu_custom_call.1} parent=11 // pred_fallthru
          _
        // Predicated region
        $region21: #{tpu_custom_call.1} parent=11 // pred_check
          %p182 = pneg %p104
        $region22: #{tpu_custom_call.1} parent=11 // pred_check_branch
          %184 = sbr.rel (%p182) target = $region24
        $region23: #{tpu_custom_call.1} parent=11 // pred_region
          _
        $region24: #{tpu_custom_call.1} parent=11 // pred_fallthru
          _
        // Predicated region
        $region25: #{tpu_custom_call.1} parent=11 // pred_check
          %p185 = pneg %p125
        $region26: #{tpu_custom_call.1} parent=11 // pred_check_branch
          %187 = sbr.rel (%p185) target = $region28
        $region27: #{tpu_custom_call.1} parent=11 // pred_region
          _
        $region28: #{tpu_custom_call.1} parent=11 // pred_fallthru
          _
      $region12: #{tpu_custom_call.1} parent=5 // pred_fallthru
        _
      %p188 = scmp.lt.s32.totalorder %s15, 2
      // Predicated region
      $region29: #{tpu_custom_call.1} parent=5 // pred_check
        %p189 = pneg %p188
      $region30: #{tpu_custom_call.1} parent=5 // pred_check_branch
        %191 = sbr.rel (%p189) target = $region32
      $region31: #{tpu_custom_call.1} parent=5 // pred_region
        // Predicated region
        $region33: #{tpu_custom_call.1} parent=31 // pred_check
          %p192 = pneg %p35
        $region34: #{tpu_custom_call.1} parent=31 // pred_check_branch
          %194 = sbr.rel (%p192) target = $region36
        $region35: #{tpu_custom_call.1} parent=31 // pred_region
          %p195 = scmp.lt.s32.totalorder %s15, 1
          %s196 = scalar_select %p195, %s15, 1
          %s197 = smul.addr %s196, 2
          %s198 = smul.addr %s197, 4
          %s199 = scalar_lea.vmem %s0, %s198
        $region36: #{tpu_custom_call.1} parent=31 // pred_fallthru
          _
      $region32: #{tpu_custom_call.1} parent=5 // pred_fallthru
        _
      %p200 = scmp.le.s32.totalorder 1, %s15
      %p201 = scmp.lt.s32.totalorder %s15, 3
      %p202 = pnand %p200, %p201
      %p203 = pneg %p202
      // Predicated region
      $region37: #{tpu_custom_call.1} parent=5 // pred_check
        _
      $region38: #{tpu_custom_call.1} parent=5 // pred_check_branch
        %205 = sbr.rel (%p202) target = $region40
      $region39: #{tpu_custom_call.1} parent=5 // pred_region
        %s206 = ssub.s32 %s15, 1
        // Predicated region
        $region41: #{tpu_custom_call.1} parent=39 // pred_check
          %p207 = pneg %p62
        $region42: #{tpu_custom_call.1} parent=39 // pred_check_branch
          %209 = sbr.rel (%p207) target = $region44
        $region43: #{tpu_custom_call.1} parent=39 // pred_region
          %210 = dma.done [#allocation3], 1152
        $region44: #{tpu_custom_call.1} parent=39 // pred_fallthru
          _
        %p211 = scmp.lt.s32.totalorder %s20, 1
        %s212 = scalar_select %p211, %s20, 1
        %s213 = smul.addr %s212, 2
        %s214 = smul.addr %s213, 4
        %s215 = scalar_lea.vmem %s0, %s214
        %p216 = pneg %p41
        %p217 = pneg %p38
        %p218 = pneg %p62
        %p219 = pneg %p59
        %p220 = pneg %p83
        %p221 = pneg %p80
        %p222 = pneg %p104
        %p223 = pneg %p101
        %p224 = pneg %p125
        %p225 = pneg %p122
        %p226 = pneg %p151
        %p227 = pneg %p148
        %s228 = sand.u32 %s138, 1
        %s229 = scalar_lea.sflag [#allocation4], %s228
        %s230 = sand.u32 %s138, 1
        %s231 = smul.addr %s230, 16
        %s232 = scalar_lea.vmem [#allocation5], %s231
        %p233 = scmp.lt.s32.totalorder %s20, 1
        %s234 = scalar_select %p233, %s20, 1
        %s235 = smul.addr %s234, 2
        %s236 = smul.addr %s235, 4
        %s237 = scalar_lea.vmem %s0, %s236
        %v238 = vld [vmem:[%s237] sm:$0xff]
        %s239 = scalar_lea.vmem [#allocation2], 32
        %v240 = vld [vmem:[%s239] sm:$0xff]
        %v241 = vmul.f32 %v238, %v240
        %v243 = vcombine.high %v238, %v238
        %245 = vrot.lane.b32.xlu0 %v238, 17
        %v246 = vpop.permute.xlu0 %245
        %247 = vrot.lane.b32.xlu0 %v243, 17
        %v248 = vpop.permute.xlu0 %247
        %v249 = vlaneseq
        %v250 = vand.u32 %v249, 127
        %vm251 = vcmp.lt.s32.totalorder %v250, 17
        %v252 = vsel %vm251, %v246, %v248
        %v253 = vsel %vm251, %v248, %v246
        %v254 = vld [vmem:[#allocation2] sm:$0xff]
        %v256 = vcombine.high %v254, %v254
        %v258 = vmul.f32 %v253, %v254
        %v259 = vmul.f32 %v252, %v256
        %v262 = vcombine.low %v258, %v259
        %v264 = vadd.f32 %v241, %v262
        %265 = vrot.lane.b32.xlu0 %v238, 16
        %v266 = vpop.permute.xlu0 %265
        %267 = vrot.lane.b32.xlu0 %v243, 16
        %v268 = vpop.permute.xlu0 %267
        %vm269 = vcmp.lt.s32.totalorder %v250, 16
        %v270 = vsel %vm269, %v266, %v268
        %v271 = vsel %vm269, %v268, %v266
        %s272 = scalar_lea.vmem [#allocation2], 8
        %v273 = vld [vmem:[%s272] sm:$0xff]
        %v275 = vcombine.high %v273, %v273
        %v277 = vmul.f32 %v271, %v273
        %v278 = vmul.f32 %v270, %v275
        %v281 = vcombine.low %v277, %v278
        %v283 = vadd.f32 %v264, %v281
        %284 = vrot.lane.b32.xlu0 %v238, 15
        %v285 = vpop.permute.xlu0 %284
        %286 = vrot.lane.b32.xlu0 %v243, 15
        %v287 = vpop.permute.xlu0 %286
        %vm288 = vcmp.lt.s32.totalorder %v250, 15
        %v289 = vsel %vm288, %v285, %v287
        %v290 = vsel %vm288, %v287, %v285
        %s291 = scalar_lea.vmem [#allocation2], 16
        %v292 = vld [vmem:[%s291] sm:$0xff]
        %v294 = vcombine.high %v292, %v292
        %v296 = vmul.f32 %v290, %v292
        %v297 = vmul.f32 %v289, %v294
        %v300 = vcombine.low %v296, %v297
        %v302 = vadd.f32 %v283, %v300
        %303 = vrot.lane.b32.xlu0 %v238, 1
        %v304 = vpop.permute.xlu0 %303
        %305 = vrot.lane.b32.xlu0 %v243, 1
        %v306 = vpop.permute.xlu0 %305
        %vm307 = vcmp.lt.s32.totalorder %v250, 1
        %v308 = vsel %vm307, %v304, %v306
        %v309 = vsel %vm307, %v306, %v304
        %s310 = scalar_lea.vmem [#allocation2], 24
        %v311 = vld [vmem:[%s310] sm:$0xff]
        %v313 = vcombine.high %v311, %v311
        %v315 = vmul.f32 %v309, %v311
        %v316 = vmul.f32 %v308, %v313
        %v319 = vcombine.low %v315, %v316
        %v321 = vadd.f32 %v302, %v319
        %322 = vrot.lane.b32.xlu0 %v238, 127
        %v323 = vpop.permute.xlu0 %322
        %324 = vrot.lane.b32.xlu0 %v243, 127
        %v325 = vpop.permute.xlu0 %324
        %vm326 = vcmp.lt.s32.totalorder %v250, 127
        %v327 = vsel %vm326, %v323, %v325
        %v328 = vsel %vm326, %v325, %v323
        %s329 = scalar_lea.vmem [#allocation2], 40
        %v330 = vld [vmem:[%s329] sm:$0xff]
        %v332 = vcombine.high %v330, %v330
        %v334 = vmul.f32 %v327, %v330
        %v335 = vmul.f32 %v328, %v332
        %v338 = vcombine.low %v334, %v335
        %v340 = vadd.f32 %v321, %v338
        %341 = vrot.lane.b32.xlu0 %v238, 113
        %v342 = vpop.permute.xlu0 %341
        %343 = vrot.lane.b32.xlu0 %v243, 113
        %v344 = vpop.permute.xlu0 %343
        %vm345 = vcmp.lt.s32.totalorder %v250, 113
        %v346 = vsel %vm345, %v342, %v344
        %v347 = vsel %vm345, %v344, %v342
        %s348 = scalar_lea.vmem [#allocation2], 48
        %v349 = vld [vmem:[%s348] sm:$0xff]
        %v351 = vcombine.high %v349, %v349
        %v353 = vmul.f32 %v346, %v349
        %v354 = vmul.f32 %v347, %v351
        %v357 = vcombine.low %v353, %v354
        %v359 = vadd.f32 %v340, %v357
        %360 = vrot.lane.b32.xlu0 %v238, 112
        %v361 = vpop.permute.xlu0 %360
        %362 = vrot.lane.b32.xlu0 %v243, 112
        %v363 = vpop.permute.xlu0 %362
        %vm364 = vcmp.lt.s32.totalorder %v250, 112
        %v365 = vsel %vm364, %v361, %v363
        %v366 = vsel %vm364, %v363, %v361
        %s367 = scalar_lea.vmem [#allocation2], 56
        %v368 = vld [vmem:[%s367] sm:$0xff]
        %v370 = vcombine.high %v368, %v368
        %v372 = vmul.f32 %v365, %v368
        %v373 = vmul.f32 %v366, %v370
        %v376 = vcombine.low %v372, %v373
        %v378 = vadd.f32 %v359, %v376
        %379 = vrot.lane.b32.xlu0 %v238, 111
        %v380 = vpop.permute.xlu0 %379
        %381 = vrot.lane.b32.xlu0 %v243, 111
        %v382 = vpop.permute.xlu0 %381
        %vm383 = vcmp.lt.s32.totalorder %v250, 111
        %v384 = vsel %vm383, %v380, %v382
        %v385 = vsel %vm383, %v382, %v380
        %s386 = scalar_lea.vmem [#allocation2], 64
        %v387 = vld [vmem:[%s386] sm:$0xff]
        %v389 = vcombine.high %v387, %v387
        %v391 = vmul.f32 %v384, %v387
        %v392 = vmul.f32 %v385, %v389
        %v395 = vcombine.low %v391, %v392
        %v397 = vadd.f32 %v378, %v395
        %v398 = vld [vmem:[%s2] sm:$0xf]
        %400 = vset.pattern.permute.xlu0 0
        %401 = vperm.xlu0 %400, %v398
        %v402 = vpop.permute.xlu0 %401
        %v404 = vunpack.c.l.s4 839922192
        %v405 = vunpack.c.0.s8 %v404
        %v406 = vlaneseq
        %v407 = vshrl.u32 %v406, 7
        %v408 = vsub.s32 %v405, %v407
        %v409 = vrot.slane %v402, %v408
        %v411 = vadd.f32 %v397, %v409
        %v412 = vmax.f32 %v411, 0.0
        %v413 = vld [vmem:[%s3] sm:$0xff]
        %415 = vset.pattern.permute.xlu0 0
        %416 = vperm.xlu0 %415, %v413
        %v417 = vpop.permute.xlu0 %416
        %v420 = vlaneseq
        %v421 = vshrl.u32 %v420, 7
        %v422 = vsub.s32 0, %v421
        %v423 = vrot.slane %v412, %v422
        %v424 = vlaneseq
        %v425 = vshrl.u32 %v424, 7
        %v426 = vsub.s32 4, %v425
        %v427 = vrot.slane %v412, %v426
        %v430 = vlaneseq
        %v431 = vshrl.u32 %v430, 7
        %v432 = vsub.s32 0, %v431
        %v433 = vrot.slane %v423, %v432
        %v434 = vlaneseq
        %v435 = vshrl.u32 %v434, 7
        %v436 = vsub.s32 0, %v435
        %v437 = vrot.slane %v427, %v436
        %v438 = vmul.f32 %v417, %v433
        %v439 = vmul.f32 %v417, %v437
        %s440 = scalar_lea.vmem %s3, 8
        %v441 = vld [vmem:[%s440] sm:$0xff]
        %443 = vset.pattern.permute.xlu0 0
        %444 = vperm.xlu0 %443, %v441
        %v445 = vpop.permute.xlu0 %444
        %v447 = vlaneseq
        %v448 = vshrl.u32 %v447, 7
        %v449 = vsub.s32 1, %v448
        %v450 = vrot.slane %v412, %v449
        %v451 = vlaneseq
        %v452 = vshrl.u32 %v451, 7
        %v453 = vsub.s32 5, %v452
        %v454 = vrot.slane %v412, %v453
        %v457 = vlaneseq
        %v458 = vshrl.u32 %v457, 7
        %v459 = vsub.s32 1, %v458
        %v460 = vrot.slane %v450, %v459
        %v461 = vlaneseq
        %v462 = vshrl.u32 %v461, 7
        %v463 = vsub.s32 1, %v462
        %v464 = vrot.slane %v454, %v463
        %v465 = vmul.f32 %v445, %v460
        %v466 = vmul.f32 %v445, %v464
        %v467 = vadd.f32 %v438, %v465
        %v468 = vadd.f32 %v439, %v466
        %s469 = scalar_lea.vmem %s3, 16
        %v470 = vld [vmem:[%s469] sm:$0xff]
        %472 = vset.pattern.permute.xlu0 0
        %473 = vperm.xlu0 %472, %v470
        %v474 = vpop.permute.xlu0 %473
        %v476 = vlaneseq
        %v477 = vshrl.u32 %v476, 7
        %v478 = vsub.s32 2, %v477
        %v479 = vrot.slane %v412, %v478
        %v480 = vlaneseq
        %v481 = vshrl.u32 %v480, 7
        %v482 = vsub.s32 6, %v481
        %v483 = vrot.slane %v412, %v482
        %v486 = vlaneseq
        %v487 = vshrl.u32 %v486, 7
        %v488 = vsub.s32 2, %v487
        %v489 = vrot.slane %v479, %v488
        %v490 = vlaneseq
        %v491 = vshrl.u32 %v490, 7
        %v492 = vsub.s32 2, %v491
        %v493 = vrot.slane %v483, %v492
        %v494 = vmul.f32 %v474, %v489
        %v495 = vmul.f32 %v474, %v493
        %v496 = vadd.f32 %v467, %v494
        %v497 = vadd.f32 %v468, %v495
        %s498 = scalar_lea.vmem %s3, 24
        %v499 = vld [vmem:[%s498] sm:$0xff]
        %501 = vset.pattern.permute.xlu0 0
        %502 = vperm.xlu0 %501, %v499
        %v503 = vpop.permute.xlu0 %502
        %v505 = vlaneseq
        %v506 = vshrl.u32 %v505, 7
        %v507 = vsub.s32 3, %v506
        %v508 = vrot.slane %v412, %v507
        %v509 = vlaneseq
        %v510 = vshrl.u32 %v509, 7
        %v511 = vsub.s32 7, %v510
        %v512 = vrot.slane %v412, %v511
        %v515 = vlaneseq
        %v516 = vshrl.u32 %v515, 7
        %v517 = vsub.s32 3, %v516
        %v518 = vrot.slane %v508, %v517
        %v519 = vlaneseq
        %v520 = vshrl.u32 %v519, 7
        %v521 = vsub.s32 3, %v520
        %v522 = vrot.slane %v512, %v521
        %v523 = vmul.f32 %v503, %v518
        %v524 = vmul.f32 %v503, %v522
        %v525 = vadd.f32 %v496, %v523
        %v526 = vadd.f32 %v497, %v524
        %v527 = vld [vmem:[%s4] sm:$0xff]
        %529 = vset.pattern.permute.xlu0 0
        %530 = vperm.xlu0 %529, %v527
        %v531 = vpop.permute.xlu0 %530
        %v533 = vadd.f32 %v525, %v531
        %v534 = vadd.f32 %v526, %v531
        %v535 = vmax.f32 %v533, 0.0
        %v536 = vmax.f32 %v534, 0.0
        %537 = vst [vmem:[%s232] sm:$0xff] %v535
        %538 = vst [vmem:[%s232 + $0x8] sm:$0xff] %v536
        %s539 = sand.u32 %s138, 1
        %s540 = scalar_lea.sflag [#allocation4], %s539
        %s541 = sand.u32 %s138, 1
        %s542 = smul.addr %s541, 16
        %s543 = scalar_lea.vmem [#allocation5], %s542
        // Predicated region
        $region45: #{tpu_custom_call.1} parent=39 // pred_check
          %p544 = pneg %p148
        $region46: #{tpu_custom_call.1} parent=39 // pred_check_branch
          %546 = sbr.rel (%p544) target = $region48
        $region47: #{tpu_custom_call.1} parent=39 // pred_region
          %s548 = ssub.s32 256, 256
          %549 = vsyncadd %s540, %s548
          %s550 = smul.addr %s20, 2
          %s551 = smul.addr %s550, 128
          %s552 = scalar_lea.hbm %s5, %s551
          %s554 = sshll.u32 %s543, 4
          %s555 = int_to_ptr.vmem [resolvable:$true] %s554
          %557 = dma.vmem_to_hbm [thread:$0]  %s555, 256, %s552, %s540
        $region48: #{tpu_custom_call.1} parent=39 // pred_fallthru
          _
      $region40: #{tpu_custom_call.1} parent=5 // pred_fallthru
        _
      %p558 = scmp.le.s32.totalorder 2, %s15
      // Predicated region
      $region49: #{tpu_custom_call.1} parent=5 // pred_check
        %p559 = pneg %p558
      $region50: #{tpu_custom_call.1} parent=5 // pred_check_branch
        %561 = sbr.rel (%p559) target = $region52
      $region51: #{tpu_custom_call.1} parent=5 // pred_region
        %s562 = ssub.s32 %s15, 2
        // Predicated region
        $region53: #{tpu_custom_call.1} parent=51 // pred_check
          %p563 = pneg %p154
        $region54: #{tpu_custom_call.1} parent=51 // pred_check_branch
          %565 = sbr.rel (%p563) target = $region56
        $region55: #{tpu_custom_call.1} parent=51 // pred_region
          %s566 = sand.u32 %s139, 1
          %s567 = scalar_lea.sflag [#allocation4], %s566
          %s568 = sand.u32 %s139, 1
          %s569 = smul.addr %s568, 16
          %s570 = scalar_lea.vmem [#allocation5], %s569
          %571 = dma.done %s567, 256
        $region56: #{tpu_custom_call.1} parent=51 // pred_fallthru
          _
      $region52: #{tpu_custom_call.1} parent=5 // pred_fallthru
        _
    $region6: #{tpu_custom_call.1} parent=1 // loop_footer
      %s19 = sadd.s32 1, %s15
    $region7: #{tpu_custom_call.1} parent=1 // loop_footer_branch
      %14 = sbr.rel target = $region3
    $region8: #{tpu_custom_call.1} parent=1 // loop_exit
      _
    %572 = vsyncpa [#allocation3], 1
    %s573 = scalar_lea.sflag [#allocation3], 1
    %574 = vsyncpa %s573, 1
    %575 = vsyncpa [#allocation4], 1
    %s576 = scalar_lea.sflag [#allocation4], 1
    %577 = vsyncpa %s576, 1

</llo_original>
